<compile_context>
chip_gen: v7x
topology: tpu7x:2x2x1
jax: 0.10.0
libtpu: 0.0.40
codegen_flags: <defaults>
</compile_context>

<pallas_src>
import functools
import math

import jax
import jax.numpy as jnp
from jax import lax
from jax.experimental import pallas as pl
from jax.experimental.pallas import tpu as pltpu


def _round_up(x: int, m: int) -> int:
    return ((x + m - 1) // m) * m


def _mlp_mixer_kernel(x_ref, w1_ref, b1_ref, w2_ref, b2_ref, o_ref, *, mxu_dtype):
    x = x_ref[...]          # (tm, Dp)   streamed row tile
    w1 = w1_ref[...]        # (Dp, Hp)   resident in VMEM (single-buffered)
    w2 = w2_ref[...]        # (Hp, Dp)   resident in VMEM (single-buffered)
    if mxu_dtype is not None:
        x = x.astype(mxu_dtype)
        w1 = w1.astype(mxu_dtype)
        w2 = w2.astype(mxu_dtype)

    # fc1: (tm, Dp) @ (Dp, Hp), f32 MXU accumulation, f32 bias add.
    h = jnp.dot(x, w1, preferred_element_type=jnp.float32)
    h = h + b1_ref[...]

    # Exact GELU (PyTorch F.gelu default): 0.5*x*(1+erf(x/sqrt(2))), in f32.
    inv_sqrt2 = jnp.float32(1.0 / math.sqrt(2.0))
    h = 0.5 * h * (1.0 + lax.erf(h * inv_sqrt2))

    if mxu_dtype is not None:
        h = h.astype(mxu_dtype)

    # fc2: (tm, Hp) @ (Hp, Dp), f32 MXU accumulation, f32 bias add.
    y = jnp.dot(h, w2, preferred_element_type=jnp.float32)
    y = y + b2_ref[...]
    o_ref[...] = y.astype(o_ref.dtype)


def mlp_mixer(x, w1, b1, w2, b2, *, row_tile=256, mxu_dtype=None):
    """y = gelu(x @ w1 + b1) @ w2 + b2.

    x: [..., dim]; w1: [dim, hidden]; b1: [hidden]; w2: [hidden, dim]; b2: [dim].
    (Weights stored as (in, out), i.e. transposed vs. torch.nn.Linear storage.)
    """
    orig_shape = x.shape
    dim = orig_shape[-1]
    hidden = w1.shape[1]
    x2d = x.reshape(-1, dim)
    n = x2d.shape[0]

    # Lane-dense padding of feature / hidden dims (multiples of 128).
    dim_p = _round_up(dim, 128)
    hid_p = _round_up(hidden, 128)

    # Row tile: fill the MXU M dimension, multiple of 16 (bf16-safe), but never
    # bigger than the (rounded-up) row count so tiny inputs aren't over-padded.
    tm = max(16, min(int(row_tile), _round_up(n, 16)))
    n_p = _round_up(n, tm)

    # Zero-pad; zeros propagate exactly through fc1 -> GELU -> fc2.
    x_p = jnp.zeros((n_p, dim_p), x.dtype).at[:n, :dim].set(x2d)
    w1_p = jnp.zeros((dim_p, hid_p), w1.dtype).at[:dim, :hidden].set(w1)
    b1_p = jnp.zeros((1, hid_p), jnp.float32).at[0, :hidden].set(b1.astype(jnp.float32))
    w2_p = jnp.zeros((hid_p, dim_p), w2.dtype).at[:hidden, :dim].set(w2)
    b2_p = jnp.zeros((1, dim_p), jnp.float32).at[0, :dim].set(b2.astype(jnp.float32))

    bpe_w = jnp.dtype(w1_p.dtype).itemsize
    bpe_x = jnp.dtype(x.dtype).itemsize

    # VMEM budget: single-buffered resident weights/biases + double-buffered
    # x/out row tiles + f32 intermediates, with headroom.
    resident_bytes = (dim_p * hid_p + hid_p * dim_p) * bpe_w + (hid_p + dim_p) * 4
    stream_bytes = 2 * 2 * tm * dim_p * bpe_x            # x + out, double buffered
    interm_bytes = (tm * hid_p + tm * dim_p) * 4 * 2     # live h / y values
    needed = int(1.25 * (resident_bytes + stream_bytes + interm_bytes)) + (4 << 20)
    vmem_limit = int(min(max(needed, 32 << 20), 128 << 20))
    # TODO(synk): for very large dim*hidden (weights > ~48 MiB on v7x) add an
    # H-tiled "arbitrary" grid axis with a (tm, dim) f32 accumulator instead of
    # full weight residency.

    cost = pl.CostEstimate(
        flops=4 * n_p * dim_p * hid_p,                   # two matmuls
        transcendentals=n_p * hid_p,                     # erf in the GELU
        bytes_accessed=(2 * n_p * dim_p * bpe_x          # x in + y out
                        + 2 * dim_p * hid_p * bpe_w      # W1 + W2
                        + (hid_p + dim_p) * 4),          # biases
    )

    resident_spec = pl.BlockSpec(memory_space=pltpu.MemorySpace.VMEM)

    out_p = pl.pallas_call(
        functools.partial(_mlp_mixer_kernel, mxu_dtype=mxu_dtype),
        out_shape=jax.ShapeDtypeStruct((n_p, dim_p), x.dtype),
        grid_spec=pltpu.PrefetchScalarGridSpec(
            num_scalar_prefetch=0,
            grid=(n_p // tm,),
            in_specs=[
                pl.BlockSpec((tm, dim_p), lambda i: (i, 0)),  # x row tile
                resident_spec,                                # W1 (resident)
                resident_spec,                                # b1 (resident)
                resident_spec,                                # W2 (resident)
                resident_spec,                                # b2 (resident)
            ],
            out_specs=pl.BlockSpec((tm, dim_p), lambda i: (i, 0)),
        ),
        compiler_params=pltpu.CompilerParams(
            dimension_semantics=("parallel",),   # shards rows across v7x's 2 TCs
            vmem_limit_bytes=vmem_limit,
        ),
        cost_estimate=cost,
    )(x_p, w1_p, b1_p, w2_p, b2_p)

    return out_p[:n, :dim].reshape(orig_shape)


def _reference(x, w1, b1, w2, b2):
    h = x @ w1 + b1
    h = jax.nn.gelu(h, approximate=False)
    return h @ w2 + b2


if __name__ == "__main__":
    # Small shapes consistent with the module: tokens of feature size `dim`.
    batch, seq, dim, hidden = 2, 8, 32, 64

    key = jax.random.PRNGKey(0)
    kx, kw1, kb1, kw2, kb2 = jax.random.split(key, 5)

    x = jax.random.normal(kx, (batch, seq, dim), dtype=jnp.float32)

    # Deterministic param init (mimics nn.Linear uniform(-1/sqrt(fan_in), ...)).
    lim1 = 1.0 / math.sqrt(dim)
    lim2 = 1.0 / math.sqrt(hidden)
    w1 = jax.random.uniform(kw1, (dim, hidden), jnp.float32, -lim1, lim1)
    b1 = jax.random.uniform(kb1, (hidden,), jnp.float32, -lim1, lim1)
    w2 = jax.random.uniform(kw2, (hidden, dim), jnp.float32, -lim2, lim2)
    b2 = jax.random.uniform(kb2, (dim,), jnp.float32, -lim2, lim2)

    y = mlp_mixer(x, w1, b1, w2, b2)
    y = jax.block_until_ready(y)

    y_ref = _reference(x, w1, b1, w2, b2)
    assert y.shape == x.shape
    assert jnp.allclose(y, y_ref, atol=1e-5, rtol=1e-5), "mismatch vs reference"

    print("KERNEL_OK")
</pallas_src>

<mosaic_0001>
module attributes {stable_mosaic.version = 11 : i64} {
  func.func @_mlp_mixer_kernel(%arg0: i32, %arg1: memref<16x128xf32, #tpu.memory_space<vmem>>, %arg2: memref<128x128xf32, #tpu.memory_space<vmem>>, %arg3: memref<1x128xf32, #tpu.memory_space<vmem>>, %arg4: memref<128x128xf32, #tpu.memory_space<vmem>>, %arg5: memref<1x128xf32, #tpu.memory_space<vmem>>, %arg6: memref<16x128xf32, #tpu.memory_space<vmem>>) attributes {dimension_semantics = [#tpu.dimension_semantics<parallel>], iteration_bounds = array<i64: 1>, scalar_prefetch = 0 : i64, scratch_operands = 0 : i64, tpu.core_type = #tpu.core_type<tc>, window_params = [{transform_indices = @transform_0, window_bounds = array<i64: 16, 128>}, {pipeline_mode = #tpu.pipeline_mode<synchronous>, transform_indices = @transform_1, window_bounds = array<i64: 128, 128>}, {pipeline_mode = #tpu.pipeline_mode<synchronous>, transform_indices = @transform_2, window_bounds = array<i64: 1, 128>}, {pipeline_mode = #tpu.pipeline_mode<synchronous>, transform_indices = @transform_3, window_bounds = array<i64: 128, 128>}, {pipeline_mode = #tpu.pipeline_mode<synchronous>, transform_indices = @transform_4, window_bounds = array<i64: 1, 128>}, {transform_indices = @transform_5, window_bounds = array<i64: 16, 128>}]} {
    %c0 = arith.constant 0 : index
    %c0_0 = arith.constant 0 : index
    %0 = vector.load %arg1[%c0, %c0_0] : memref<16x128xf32, #tpu.memory_space<vmem>>, vector<16x128xf32>
    %c0_1 = arith.constant 0 : index
    %c0_2 = arith.constant 0 : index
    %1 = vector.load %arg2[%c0_1, %c0_2] : memref<128x128xf32, #tpu.memory_space<vmem>>, vector<128x128xf32>
    %c0_3 = arith.constant 0 : index
    %c0_4 = arith.constant 0 : index
    %2 = vector.load %arg4[%c0_3, %c0_4] : memref<128x128xf32, #tpu.memory_space<vmem>>, vector<128x128xf32>
    %cst = arith.constant dense<0.000000e+00> : vector<16x128xf32>
    %3 = tpu.matmul %0, %1, %cst {dimension_numbers = #tpu.dot_dimension_numbers<[1], [0], [0], [1], [0, 0, 1, 1], [], []>} : vector<16x128xf32>, vector<128x128xf32>, vector<16x128xf32> -> vector<16x128xf32>
    %c0_5 = arith.constant 0 : index
    %c0_6 = arith.constant 0 : index
    %4 = vector.load %arg3[%c0_5, %c0_6] : memref<1x128xf32, #tpu.memory_space<vmem>>, vector<1x128xf32>
    %5 = vector.broadcast %4 : vector<1x128xf32> to vector<16x128xf32>
    %6 = arith.addf %3, %5 : vector<16x128xf32>
    %cst_7 = arith.constant 5.000000e-01 : f32
    %7 = vector.broadcast %cst_7 : f32 to vector<16x128xf32>
    %8 = arith.mulf %7, %6 : vector<16x128xf32>
    %cst_8 = arith.constant 0.707106769 : f32
    %9 = vector.broadcast %cst_8 : f32 to vector<16x128xf32>
    %10 = arith.mulf %6, %9 : vector<16x128xf32>
    %11 = math.erf %10 : vector<16x128xf32>
    %cst_9 = arith.constant 1.000000e+00 : f32
    %12 = vector.broadcast %cst_9 : f32 to vector<16x128xf32>
    %13 = arith.addf %12, %11 : vector<16x128xf32>
    %14 = arith.mulf %8, %13 : vector<16x128xf32>
    %cst_10 = arith.constant dense<0.000000e+00> : vector<16x128xf32>
    %15 = tpu.matmul %14, %2, %cst_10 {dimension_numbers = #tpu.dot_dimension_numbers<[1], [0], [0], [1], [0, 0, 1, 1], [], []>} : vector<16x128xf32>, vector<128x128xf32>, vector<16x128xf32> -> vector<16x128xf32>
    %c0_11 = arith.constant 0 : index
    %c0_12 = arith.constant 0 : index
    %16 = vector.load %arg5[%c0_11, %c0_12] : memref<1x128xf32, #tpu.memory_space<vmem>>, vector<1x128xf32>
    %17 = vector.broadcast %16 : vector<1x128xf32> to vector<16x128xf32>
    %18 = arith.addf %15, %17 : vector<16x128xf32>
    %c0_13 = arith.constant 0 : index
    %c0_14 = arith.constant 0 : index
    %19 = vector.load %arg6[%c0_13, %c0_14] : memref<16x128xf32, #tpu.memory_space<vmem>>, vector<16x128xf32>
    tpu.vector_store %arg6[%c0_13, %c0_14], %18 {strides = array<i32>} : memref<16x128xf32, #tpu.memory_space<vmem>>, vector<16x128xf32>,
    return
  }
  func.func @transform_0(%arg0: i32) -> (i32, i32) {
    %c0_i32 = arith.constant 0 : i32
    %c0_i32_0 = arith.constant 0 : i32
    return %arg0, %c0_i32 : i32, i32
  }
  func.func @transform_1(%arg0: i32) -> (i32, i32) {
    %c0_i32 = arith.constant 0 : i32
    %c0_i32_0 = arith.constant 0 : i32
    %c0_i32_1 = arith.constant 0 : i32
    return %c0_i32, %c0_i32_0 : i32, i32
  }
  func.func @transform_2(%arg0: i32) -> (i32, i32) {
    %c0_i32 = arith.constant 0 : i32
    %c0_i32_0 = arith.constant 0 : i32
    %c0_i32_1 = arith.constant 0 : i32
    return %c0_i32, %c0_i32_0 : i32, i32
  }
  func.func @transform_3(%arg0: i32) -> (i32, i32) {
    %c0_i32 = arith.constant 0 : i32
    %c0_i32_0 = arith.constant 0 : i32
    %c0_i32_1 = arith.constant 0 : i32
    return %c0_i32, %c0_i32_0 : i32, i32
  }
  func.func @transform_4(%arg0: i32) -> (i32, i32) {
    %c0_i32 = arith.constant 0 : i32
    %c0_i32_0 = arith.constant 0 : i32
    %c0_i32_1 = arith.constant 0 : i32
    return %c0_i32, %c0_i32_0 : i32, i32
  }
  func.func @transform_5(%arg0: i32) -> (i32, i32) {
    %c0_i32 = arith.constant 0 : i32
    %c0_i32_0 = arith.constant 0 : i32
    return %arg0, %c0_i32 : i32, i32
  }
}

</mosaic_0001>

<llo_original>
// kernel: tpu_custom_call.1
$region0: #{tpu_custom_call.1}
  #allocation0 [shape = 'u32[]', space=smem, size = 0x4, offset = 0x4, fixed_abs, tag = 'smem constant byte address 0x4 - core index']
  #allocation1 [shape = 'u32[144,128]{1,0:T(1,128)}', space=vmem, size = 0x12000, scoped, tag = 'internal scratch']
  %s0 = inlined_call_operand.hbm [shape: f32[16,128], index: 0, kind: input, shape index: {}]
  %s1 = inlined_call_operand.hbm [shape: f32[128,128], index: 1, kind: input, shape index: {}]
  %s2 = inlined_call_operand.vmem [shape: f32[1,128], index: 2, kind: input, shape index: {}]
  %s3 = inlined_call_operand.hbm [shape: f32[128,128], index: 3, kind: input, shape index: {}]
  %s4 = inlined_call_operand.vmem [shape: f32[1,128], index: 4, kind: input, shape index: {}]
  %s5 = inlined_call_operand.hbm [shape: f32[16,128], index: 5, kind: output, shape index: {}]
  %s6 = sld [smem:[#allocation0]]
  $region42: #{tpu_custom_call.1} parent=0
    _
  %s8 = ssub.s32 1, %s6
  %s9 = scalar_select 0, %s8, %s6
  $region1: #{tpu_custom_call.1} parent=0
    #allocation2 [shape = 'u8[8192]{0}', space=vmem, size = 0x2000, scoped, tag = 'input window, operand 0, single buffered']
    #allocation3 [shape = 's32[1]{0}', space=sflag, size = 0x4, scoped, tag = 'scoped memory for tpu_custom_call.1']
    #allocation4 [shape = 's32[1]{0}', space=sflag, size = 0x4, scoped, tag = 'scoped memory for tpu_custom_call.1']
    #allocation5 [shape = 'u8[65536]{0}', space=vmem, size = 0x10000, scoped, tag = 'input window, operand 1, single buffered']
    #allocation6 [shape = 's32[1]{0}', space=sflag, size = 0x4, scoped, tag = 'scoped memory for tpu_custom_call.1']
    #allocation7 [shape = 'u8[65536]{0}', space=vmem, size = 0x10000, scoped, tag = 'input window, operand 3, single buffered']
    #allocation8 [shape = 'u8[8192]{0}', space=vmem, size = 0x2000, scoped, tag = 'output window, operand 0, single buffered']
    %10 = vsyncpa [#allocation3], 0
    %11 = vsyncpa [#allocation6], 0
    %12 = vsyncpa [#allocation4], 0
    // Predicated region
    $region2: #{tpu_custom_call.1} parent=1 // pred_check
      _
    $region3: #{tpu_custom_call.1} parent=1 // pred_check_branch
      %14 = sbr.rel (0) target = $region5
    $region4: #{tpu_custom_call.1} parent=1 // pred_region
      %s16 = ssub.s32 256, 256
      %17 = vsyncadd [#allocation3], %s16
      %s18 = sshll.u32 [#allocation2], 4
      %s19 = int_to_ptr.vmem [resolvable:$true] %s18
      %24 = dma.hbm_to_vmem [thread:$0]  %s0, 256, %s19, [#allocation3], 128, 128, 8
    $region5: #{tpu_custom_call.1} parent=1 // pred_fallthru
      _
    // Predicated region
    $region6: #{tpu_custom_call.1} parent=1 // pred_check
      _
    $region7: #{tpu_custom_call.1} parent=1 // pred_check_branch
      %26 = sbr.rel (0) target = $region9
    $region8: #{tpu_custom_call.1} parent=1 // pred_region
      %s28 = ssub.s32 2048, 2048
      %29 = vsyncadd [#allocation6], %s28
      %s30 = sshll.u32 [#allocation5], 4
      %s31 = int_to_ptr.vmem [resolvable:$true] %s30
      %36 = dma.hbm_to_vmem [thread:$0]  %s1, 2048, %s31, [#allocation6], 128, 128, 8
    $region9: #{tpu_custom_call.1} parent=1 // pred_fallthru
      _
    // Predicated region
    $region10: #{tpu_custom_call.1} parent=1 // pred_check
      _
    $region11: #{tpu_custom_call.1} parent=1 // pred_check_branch
      %38 = sbr.rel (0) target = $region13
    $region12: #{tpu_custom_call.1} parent=1 // pred_region
      _
    $region13: #{tpu_custom_call.1} parent=1 // pred_fallthru
      _
    // Predicated region
    $region14: #{tpu_custom_call.1} parent=1 // pred_check
      _
    $region15: #{tpu_custom_call.1} parent=1 // pred_check_branch
      %40 = sbr.rel (0) target = $region17
    $region16: #{tpu_custom_call.1} parent=1 // pred_region
      %s42 = ssub.s32 2048, 2048
      %43 = vsyncadd [#allocation6], %s42
      %s44 = sshll.u32 [#allocation7], 4
      %s45 = int_to_ptr.vmem [resolvable:$true] %s44
      %50 = dma.hbm_to_vmem [thread:$0]  %s3, 2048, %s45, [#allocation6], 128, 128, 8
    $region17: #{tpu_custom_call.1} parent=1 // pred_fallthru
      _
    // Predicated region
    $region18: #{tpu_custom_call.1} parent=1 // pred_check
      _
    $region19: #{tpu_custom_call.1} parent=1 // pred_check_branch
      %52 = sbr.rel (0) target = $region21
    $region20: #{tpu_custom_call.1} parent=1 // pred_region
      _
    $region21: #{tpu_custom_call.1} parent=1 // pred_fallthru
      _
    // Predicated region
    $region22: #{tpu_custom_call.1} parent=1 // pred_check
      _
    $region23: #{tpu_custom_call.1} parent=1 // pred_check_branch
      %54 = sbr.rel (0) target = $region25
    $region24: #{tpu_custom_call.1} parent=1 // pred_region
      %55 = dma.done [#allocation3], 256
    $region25: #{tpu_custom_call.1} parent=1 // pred_fallthru
      _
    // Predicated region
    $region26: #{tpu_custom_call.1} parent=1 // pred_check
      _
    $region27: #{tpu_custom_call.1} parent=1 // pred_check_branch
      %57 = sbr.rel (0) target = $region29
    $region28: #{tpu_custom_call.1} parent=1 // pred_region
      %58 = dma.done [#allocation6], 2048
    $region29: #{tpu_custom_call.1} parent=1 // pred_fallthru
      _
    // Predicated region
    $region30: #{tpu_custom_call.1} parent=1 // pred_check
      _
    $region31: #{tpu_custom_call.1} parent=1 // pred_check_branch
      %60 = sbr.rel (0) target = $region33
    $region32: #{tpu_custom_call.1} parent=1 // pred_region
      %61 = dma.done [#allocation6], 2048
    $region33: #{tpu_custom_call.1} parent=1 // pred_fallthru
      _
    %v62 = vld [vmem:[#allocation2] sm:$0xff]
    %v63 = vld [vmem:[#allocation2 + $0x8] sm:$0xff]
    %v64 = vld [vmem:[#allocation5] sm:$0xff]
    %v65 = vld [vmem:[#allocation5 + $0x8] sm:$0xff]
    %v66 = vld [vmem:[#allocation5 + $0x10] sm:$0xff]
    %v67 = vld [vmem:[#allocation5 + $0x18] sm:$0xff]
    %v68 = vld [vmem:[#allocation5 + $0x20] sm:$0xff]
    %v69 = vld [vmem:[#allocation5 + $0x28] sm:$0xff]
    %v70 = vld [vmem:[#allocation5 + $0x30] sm:$0xff]
    %v71 = vld [vmem:[#allocation5 + $0x38] sm:$0xff]
    %v72 = vld [vmem:[#allocation5 + $0x40] sm:$0xff]
    %v73 = vld [vmem:[#allocation5 + $0x48] sm:$0xff]
    %v74 = vld [vmem:[#allocation5 + $0x50] sm:$0xff]
    %v75 = vld [vmem:[#allocation5 + $0x58] sm:$0xff]
    %v76 = vld [vmem:[#allocation5 + $0x60] sm:$0xff]
    %v77 = vld [vmem:[#allocation5 + $0x68] sm:$0xff]
    %v78 = vld [vmem:[#allocation5 + $0x70] sm:$0xff]
    %v79 = vld [vmem:[#allocation5 + $0x78] sm:$0xff]
    %v80 = vld [vmem:[#allocation7] sm:$0xff]
    %v81 = vld [vmem:[#allocation7 + $0x8] sm:$0xff]
    %v82 = vld [vmem:[#allocation7 + $0x10] sm:$0xff]
    %v83 = vld [vmem:[#allocation7 + $0x18] sm:$0xff]
    %v84 = vld [vmem:[#allocation7 + $0x20] sm:$0xff]
    %v85 = vld [vmem:[#allocation7 + $0x28] sm:$0xff]
    %v86 = vld [vmem:[#allocation7 + $0x30] sm:$0xff]
    %v87 = vld [vmem:[#allocation7 + $0x38] sm:$0xff]
    %v88 = vld [vmem:[#allocation7 + $0x40] sm:$0xff]
    %v89 = vld [vmem:[#allocation7 + $0x48] sm:$0xff]
    %v90 = vld [vmem:[#allocation7 + $0x50] sm:$0xff]
    %v91 = vld [vmem:[#allocation7 + $0x58] sm:$0xff]
    %v92 = vld [vmem:[#allocation7 + $0x60] sm:$0xff]
    %v93 = vld [vmem:[#allocation7 + $0x68] sm:$0xff]
    %v94 = vld [vmem:[#allocation7 + $0x70] sm:$0xff]
    %v95 = vld [vmem:[#allocation7 + $0x78] sm:$0xff]
    %v96 = vld [vmem:[%s2] sm:$0x1]
    %v98 = vlaneseq
    %v99 = vshrl.u32 %v98, 7
    %v100 = vsub.s32 0, %v99
    %v101 = vrot.slane %v96, %v100
    %103 = vmatprep.subr.mxu0 0.0
    %104 = vmatpush1.msra.mxu0 %v64
    %105 = vmatprep.subr.mxu0 0.0
    %106 = vmatpush1.msra.mxu0 %v65
    %107 = vmatprep.subr.mxu0 0.0
    %108 = vmatpush1.msra.mxu0 %v66
    %109 = vmatprep.subr.mxu0 0.0
    %110 = vmatpush1.msra.mxu0 %v67
    %111 = vmatprep.subr.mxu0 0.0
    %112 = vmatpush1.msra.mxu0 %v68
    %113 = vmatprep.subr.mxu0 0.0
    %114 = vmatpush1.msra.mxu0 %v69
    %115 = vmatprep.subr.mxu0 0.0
    %116 = vmatpush1.msra.mxu0 %v70
    %117 = vmatprep.subr.mxu0 0.0
    %118 = vmatpush1.msra.mxu0 %v71
    %119 = vmatprep.subr.mxu0 0.0
    %120 = vmatpush1.msra.mxu0 %v72
    %121 = vmatprep.subr.mxu0 0.0
    %122 = vmatpush1.msra.mxu0 %v73
    %123 = vmatprep.subr.mxu0 0.0
    %124 = vmatpush1.msra.mxu0 %v74
    %125 = vmatprep.subr.mxu0 0.0
    %126 = vmatpush1.msra.mxu0 %v75
    %127 = vmatprep.subr.mxu0 0.0
    %128 = vmatpush1.msra.mxu0 %v76
    %129 = vmatprep.subr.mxu0 0.0
    %130 = vmatpush1.msra.mxu0 %v77
    %131 = vmatprep.subr.mxu0 0.0
    %132 = vmatpush1.msra.mxu0 %v78
    %133 = vmatprep.subr.mxu0 0.0
    %134 = vmatpush1.msra.mxu0 %v79
    %135 = vmatprep.subr.mxu0 0.0
    %136 = vmatpush1.msra.mxu0 0.0
    %137 = vmatprep.subr.mxu0 0.0
    %138 = vmatpush1.msra.mxu0 0.0
    %139 = vmatprep.subr.mxu0 0.0
    %140 = vmatpush1.msra.mxu0 0.0
    %141 = vmatprep.subr.mxu0 0.0
    %142 = vmatpush1.msra.mxu0 0.0
    %143 = vmatprep.subr.mxu0 0.0
    %144 = vmatpush1.msra.mxu0 0.0
    %145 = vmatprep.subr.mxu0 0.0
    %146 = vmatpush1.msra.mxu0 0.0
    %147 = vmatprep.subr.mxu0 0.0
    %148 = vmatpush1.msra.mxu0 0.0
    %149 = vmatprep.subr.mxu0 0.0
    %150 = vmatpush1.msra.mxu0 0.0
    %151 = vmatprep.subr.mxu0 0.0
    %152 = vmatpush1.msra.mxu0 0.0
    %153 = vmatprep.subr.mxu0 0.0
    %154 = vmatpush1.msra.mxu0 0.0
    %155 = vmatprep.subr.mxu0 0.0
    %156 = vmatpush1.msra.mxu0 0.0
    %157 = vmatprep.subr.mxu0 0.0
    %158 = vmatpush1.msra.mxu0 0.0
    %159 = vmatprep.subr.mxu0 0.0
    %160 = vmatpush1.msra.mxu0 0.0
    %161 = vmatprep.subr.mxu0 0.0
    %162 = vmatpush1.msra.mxu0 0.0
    %163 = vmatprep.subr.mxu0 0.0
    %164 = vmatpush1.msra.mxu0 0.0
    %165 = vmatprep.subr.mxu0 0.0
    %166 = vmatpush1.msra.mxu0 0.0
    %167 = vmatprep.mubr.f32.mxu0 0.0
    %168 = vmatmul.mubr.f32.gmra.mrb[0].mxu0 %v62
    %v169 = vpop.f32.mrb[0].mxu0
    %v170 = vadd.f32 %v101, %v169
    %v171 = vpop.f32.mrb[0].mxu0
    %172 = vmatprep.mubr.f32.mxu0 0.0
    %173 = vmatmul.mubr.f32.gmra.mrb[0].mxu0 %v63
    %v174 = vpop.f32.mrb[0].mxu0
    %v175 = vadd.f32 %v101, %v174
    %v176 = vpop.f32.mrb[0].mxu0
    %177 = vdwg.mxu0
    %v178 = vmul.f32 %v170, 0.5
    %v179 = vmul.f32 %v175, 0.5
    %v180 = vmul.f32 %v170, 0.70710677
    %v181 = vmul.f32 %v175, 0.70710677
    %v182 = verf.f32.pop %v180
    %v183 = verf.f32.pop %v181
    %v184 = vadd.f32 %v182, 1.0
    %v185 = vadd.f32 %v183, 1.0
    %v186 = vmul.f32 %v178, %v184
    %v187 = vmul.f32 %v179, %v185
    %v188 = vld [vmem:[%s4] sm:$0x1]
    %v190 = vlaneseq
    %v191 = vshrl.u32 %v190, 7
    %v192 = vsub.s32 0, %v191
    %v193 = vrot.slane %v188, %v192
    %195 = vmatprep.subr.mxu0 0.0
    %196 = vmatpush1.msra.mxu0 %v80
    %197 = vmatprep.subr.mxu0 0.0
    %198 = vmatpush1.msra.mxu0 %v81
    %199 = vmatprep.subr.mxu0 0.0
    %200 = vmatpush1.msra.mxu0 %v82
    %201 = vmatprep.subr.mxu0 0.0
    %202 = vmatpush1.msra.mxu0 %v83
    %203 = vmatprep.subr.mxu0 0.0
    %204 = vmatpush1.msra.mxu0 %v84
    %205 = vmatprep.subr.mxu0 0.0
    %206 = vmatpush1.msra.mxu0 %v85
    %207 = vmatprep.subr.mxu0 0.0
    %208 = vmatpush1.msra.mxu0 %v86
    %209 = vmatprep.subr.mxu0 0.0
    %210 = vmatpush1.msra.mxu0 %v87
    %211 = vmatprep.subr.mxu0 0.0
    %212 = vmatpush1.msra.mxu0 %v88
    %213 = vmatprep.subr.mxu0 0.0
    %214 = vmatpush1.msra.mxu0 %v89
    %215 = vmatprep.subr.mxu0 0.0
    %216 = vmatpush1.msra.mxu0 %v90
    %217 = vmatprep.subr.mxu0 0.0
    %218 = vmatpush1.msra.mxu0 %v91
    %219 = vmatprep.subr.mxu0 0.0
    %220 = vmatpush1.msra.mxu0 %v92
    %221 = vmatprep.subr.mxu0 0.0
    %222 = vmatpush1.msra.mxu0 %v93
    %223 = vmatprep.subr.mxu0 0.0
    %224 = vmatpush1.msra.mxu0 %v94
    %225 = vmatprep.subr.mxu0 0.0
    %226 = vmatpush1.msra.mxu0 %v95
    %227 = vmatprep.subr.mxu0 0.0
    %228 = vmatpush1.msra.mxu0 0.0
    %229 = vmatprep.subr.mxu0 0.0
    %230 = vmatpush1.msra.mxu0 0.0
    %231 = vmatprep.subr.mxu0 0.0
    %232 = vmatpush1.msra.mxu0 0.0
    %233 = vmatprep.subr.mxu0 0.0
    %234 = vmatpush1.msra.mxu0 0.0
    %235 = vmatprep.subr.mxu0 0.0
    %236 = vmatpush1.msra.mxu0 0.0
    %237 = vmatprep.subr.mxu0 0.0
    %238 = vmatpush1.msra.mxu0 0.0
    %239 = vmatprep.subr.mxu0 0.0
    %240 = vmatpush1.msra.mxu0 0.0
    %241 = vmatprep.subr.mxu0 0.0
    %242 = vmatpush1.msra.mxu0 0.0
    %243 = vmatprep.subr.mxu0 0.0
    %244 = vmatpush1.msra.mxu0 0.0
    %245 = vmatprep.subr.mxu0 0.0
    %246 = vmatpush1.msra.mxu0 0.0
    %247 = vmatprep.subr.mxu0 0.0
    %248 = vmatpush1.msra.mxu0 0.0
    %249 = vmatprep.subr.mxu0 0.0
    %250 = vmatpush1.msra.mxu0 0.0
    %251 = vmatprep.subr.mxu0 0.0
    %252 = vmatpush1.msra.mxu0 0.0
    %253 = vmatprep.subr.mxu0 0.0
    %254 = vmatpush1.msra.mxu0 0.0
    %255 = vmatprep.subr.mxu0 0.0
    %256 = vmatpush1.msra.mxu0 0.0
    %257 = vmatprep.subr.mxu0 0.0
    %258 = vmatpush1.msra.mxu0 0.0
    %259 = vmatprep.mubr.f32.mxu0 0.0
    %260 = vmatmul.mubr.f32.gmra.mrb[0].mxu0 %v186
    %v261 = vpop.f32.mrb[0].mxu0
    %v262 = vadd.f32 %v193, %v261
    %v263 = vpop.f32.mrb[0].mxu0
    %264 = vmatprep.mubr.f32.mxu0 0.0
    %265 = vmatmul.mubr.f32.gmra.mrb[0].mxu0 %v187
    %v266 = vpop.f32.mrb[0].mxu0
    %v267 = vadd.f32 %v193, %v266
    %v268 = vpop.f32.mrb[0].mxu0
    %269 = vdwg.mxu0
    %270 = vst [vmem:[#allocation8] sm:$0xff] %v262
    %271 = vst [vmem:[#allocation8 + $0x8] sm:$0xff] %v267
    // Predicated region
    $region34: #{tpu_custom_call.1} parent=1 // pred_check
      _
    $region35: #{tpu_custom_call.1} parent=1 // pred_check_branch
      %273 = sbr.rel (0) target = $region37
    $region36: #{tpu_custom_call.1} parent=1 // pred_region
      %s275 = ssub.s32 256, 256
      %276 = vsyncadd [#allocation4], %s275
      %s277 = sshll.u32 [#allocation8], 4
      %s278 = int_to_ptr.vmem [resolvable:$true] %s277
      %283 = dma.vmem_to_hbm [thread:$0]  %s278, 256, %s5, [#allocation4], 128, 128, 8
    $region37: #{tpu_custom_call.1} parent=1 // pred_fallthru
      _
    // Predicated region
    $region38: #{tpu_custom_call.1} parent=1 // pred_check
      _
    $region39: #{tpu_custom_call.1} parent=1 // pred_check_branch
      %285 = sbr.rel (0) target = $region41
    $region40: #{tpu_custom_call.1} parent=1 // pred_region
      %286 = dma.done [#allocation4], 256
    $region41: #{tpu_custom_call.1} parent=1 // pred_fallthru
      _
    %287 = vsyncpa [#allocation3], 1
    %288 = vsyncpa [#allocation6], 1
    %289 = vsyncpa [#allocation4], 1

</llo_original>
